<compile_context>
chip_gen: v5e
topology: v5e:2x2
jax: 0.10.0
libtpu: 0.0.40
codegen_flags: <defaults>
</compile_context>

<pallas_src>
import functools

import jax
import jax.numpy as jnp
from jax.experimental import pallas as pl
from jax.experimental.pallas import tpu as pltpu


# ------------------------------------------------------------------ kernel

def _downsample_kernel(x_ref, w1_ref, b1_ref, w2_ref, b2_ref, o_ref, *, Ho):
    """Fused conv1(stride 2)+ReLU -> conv2(stride 1)+ReLU for Bblk images.

    x_ref : (Bblk, 2, Hp//2, W*Cin)  bf16  height-padded input, rows split by parity
    w1_ref: (3, W*Cin,   Wo*Cmid)    bf16  banded conv1 weights (one matrix per dy)
    b1_ref: (1, Wo*Cmid)             f32
    w2_ref: (3, Wo*Cmid, Wo*Cout2)   bf16  banded conv2 weights (one matrix per dy)
    b2_ref: (1, Wo*Cout2)            f32
    o_ref : (Bblk*Ho, Wo*Cout2)      f32   rows ordered (image, out_row)
    """
    Bblk = x_ref.shape[0]
    M = Bblk * Ho
    WoCmid = w1_ref.shape[2]
    WoCout2 = w2_ref.shape[2]

    xv = x_ref[...]                      # (Bblk, 2, Hp//2, W*Cin) bf16
    w1 = w1_ref[...]
    w2 = w2_ref[...]

    # ---- conv1 (stride 2): one MXU matmul per kernel row dy ----------------
    # Padded input row for output row h is 2*h + dy; after the wrapper's
    # parity split that is parity (dy % 2), contiguous rows [dy//2, dy//2+Ho).
    acc1 = jnp.zeros((M, WoCmid), jnp.float32)
    for dy in range(3):
        lhs = xv[:, dy % 2, dy // 2:dy // 2 + Ho, :].reshape(M, -1)
        acc1 = acc1 + jnp.dot(lhs, w1[dy], preferred_element_type=jnp.float32)
    y1 = jnp.maximum(acc1 + b1_ref[...], 0.0)                 # bias + ReLU in f32
    y1 = y1.reshape(Bblk, Ho, WoCmid).astype(jnp.bfloat16)    # stays on-chip

    # ---- conv2 (stride 1): width padding folded into w2, height padding is
    # two zero rows concatenated around the resident intermediate. -----------
    zrow = jnp.zeros((Bblk, 1, WoCmid), jnp.bfloat16)
    h1p = jnp.concatenate([zrow, y1, zrow], axis=1)           # (Bblk, Ho+2, Wo*Cmid)

    acc2 = jnp.zeros((M, WoCout2), jnp.float32)
    for dy in range(3):
        lhs = h1p[:, dy:dy + Ho, :].reshape(M, -1)
        acc2 = acc2 + jnp.dot(lhs, w2[dy], preferred_element_type=jnp.float32)
    y2 = jnp.maximum(acc2 + b2_ref[...], 0.0)

    # Store in the natural matmul layout; same HBM bytes as (N, Ho*Wo*Cout2).
    o_ref[...] = y2.astype(o_ref.dtype)


# ------------------------------------------------------------------ helpers

def _banded_weights(w_hwio, w_in, w_out, stride, pad):
    """HWIO (kh, kw, Cin, Cout) -> (kh, w_in*Cin, w_out*Cout) banded matrices.

    band[dy][p*Cin + c, w*Cout + o] = w[dy, dx, c, o] where p = stride*w+dx-pad;
    taps falling outside [0, w_in) are dropped, i.e. the zero padding along the
    width (and the stride) is folded into the weight matrix.
    """
    kh, kw, cin, cout = w_hwio.shape
    dx = jnp.arange(kw)[:, None, None]
    wo = jnp.arange(w_out)[None, :, None]
    p = jnp.arange(w_in)[None, None, :]
    sel = (p == stride * wo + dx - pad).astype(w_hwio.dtype)   # (kw, w_out, w_in)
    band = jnp.einsum("xwp,yxco->ypcwo", sel, w_hwio)          # (kh,w_in,Cin,w_out,Cout)
    return band.reshape(kh, w_in * cin, w_out * cout)


def _pick_batch_block(N, Ho):
    """Images per grid step: whole batch when small, else an aligned divisor."""
    if N * Ho <= 2048:
        return N
    target = max(8, 2048 // max(1, Ho))
    cands = [b for b in range(8, N + 1, 8) if N % b == 0 and b <= target]
    return max(cands) if cands else N


# ------------------------------------------------------------------ wrapper

def downsample_forward(params, x_nchw, stride=2):
    """DownSample.forward for an NCHW float32 input; returns NCHW float32."""
    N, C, H, W = x_nchw.shape
    Cmid = params["w1"].shape[3]            # == C
    Cout2 = params["w2"].shape[3]           # == stride * C
    Ho = (H + 2 - 3) // stride + 1
    Wo = (W + 2 - 3) // stride + 1

    # XLA-side layout plumbing (pure data movement, ~1x the input bytes):
    # NCHW -> lane-dense (N, H, W*C); pad the HEIGHT by 1 (width padding lives
    # in the banded weights); round padded height to even; split rows by
    # parity so the kernel's stride-2 row taps are contiguous slices.
    # TODO(synk): keep NHWC end-to-end if the surrounding model allows it and
    # drop the two wrapper transposes.
    x = jnp.transpose(x_nchw, (0, 2, 3, 1)).reshape(N, H, W * C)
    Hp = H + 2
    extra = Hp % 2
    xp = jnp.pad(x, ((0, 0), (1, 1 + extra), (0, 0))).astype(jnp.bfloat16)
    Hp += extra
    xs = xp.reshape(N, Hp // 2, 2, W * C).transpose(0, 2, 1, 3)   # (N,2,Hp/2,W*C)

    # Banded weights (stride + width padding folded in) and row-flat biases.
    w1b = _banded_weights(params["w1"], W, Wo, stride, 1).astype(jnp.bfloat16)
    w2b = _banded_weights(params["w2"], Wo, Wo, 1, 1).astype(jnp.bfloat16)
    b1f = jnp.tile(params["b1"].astype(jnp.float32), (Wo,)).reshape(1, Wo * Cmid)
    b2f = jnp.tile(params["b2"].astype(jnp.float32), (Wo,)).reshape(1, Wo * Cout2)

    Bblk = _pick_batch_block(N, Ho)                            # whole batch here
    grid = (N // Bblk,)

    kernel = functools.partial(_downsample_kernel, Ho=Ho)
    out_flat = pl.pallas_call(
        kernel,
        out_shape=jax.ShapeDtypeStruct((N * Ho, Wo * Cout2), jnp.float32),
        grid_spec=pltpu.PrefetchScalarGridSpec(
            num_scalar_prefetch=0,
            grid=grid,
            in_specs=[
                pl.BlockSpec((Bblk, 2, Hp // 2, W * C), lambda b: (b, 0, 0, 0)),
                pl.BlockSpec((3, W * C, Wo * Cmid), lambda b: (0, 0, 0)),
                pl.BlockSpec((1, Wo * Cmid), lambda b: (0, 0)),
                pl.BlockSpec((3, Wo * Cmid, Wo * Cout2), lambda b: (0, 0, 0)),
                pl.BlockSpec((1, Wo * Cout2), lambda b: (0, 0)),
            ],
            out_specs=pl.BlockSpec((Bblk * Ho, Wo * Cout2), lambda b: (b, 0)),
        ),
        compiler_params=pltpu.CompilerParams(
            dimension_semantics=("parallel",),
            vmem_limit_bytes=32 * 1024 * 1024,
        ),
    )(xs, w1b, b1f, w2b, b2f)

    out = out_flat.reshape(N, Ho, Wo, Cout2)                   # metadata-only
    return jnp.transpose(out, (0, 3, 1, 2))                    # NHWC -> NCHW


# ------------------------------------------------------------------ reference

def _ref_forward(params, x_nchw, stride=2, bf16_inputs=False):
    """XLA reference; with bf16_inputs=True it mimics the kernel's MXU casts."""
    dn = ("NHWC", "HWIO", "NHWC")
    hi = jax.lax.Precision.HIGHEST

    def cast(a):
        a = a.astype(jnp.float32)
        return a.astype(jnp.bfloat16).astype(jnp.float32) if bf16_inputs else a

    x = jnp.transpose(x_nchw, (0, 2, 3, 1))
    y = jax.lax.conv_general_dilated(cast(x), cast(params["w1"]), (stride, stride),
                                     ((1, 1), (1, 1)), dimension_numbers=dn,
                                     precision=hi)
    y = jax.nn.relu(y + params["b1"])
    if bf16_inputs:
        y = y.astype(jnp.bfloat16).astype(jnp.float32)
    y = jax.lax.conv_general_dilated(y, cast(params["w2"]), (1, 1),
                                     ((1, 1), (1, 1)), dimension_numbers=dn,
                                     precision=hi)
    y = jax.nn.relu(y + params["b2"])
    return jnp.transpose(y, (0, 3, 1, 2))


# ------------------------------------------------------------------ params

def make_downsample_params(key, in_channels, stride=2):
    k1, k2, k3, k4 = jax.random.split(key, 4)
    bound = (9.0 * in_channels) ** -0.5                        # ~ PyTorch default init
    w1 = jax.random.uniform(k1, (3, 3, in_channels, in_channels), jnp.float32,
                            -bound, bound)
    b1 = jax.random.uniform(k2, (in_channels,), jnp.float32, -bound, bound)
    w2 = jax.random.uniform(k3, (3, 3, in_channels, stride * in_channels),
                            jnp.float32, -bound, bound)
    b2 = jax.random.uniform(k4, (stride * in_channels,), jnp.float32,
                            -bound, bound)
    return dict(w1=w1, b1=b1, w2=w2, b2=b2)


# ------------------------------------------------------------------ main

if __name__ == "__main__":
    key = jax.random.PRNGKey(0)
    kx, kp = jax.random.split(key)

    # Small shapes consistent with the module: N=2, in_channels=4, 16x16.
    x = jax.random.normal(kx, (2, 4, 16, 16), jnp.float32)
    params = make_downsample_params(kp, in_channels=4, stride=2)

    fwd = jax.jit(downsample_forward, static_argnames=("stride",))
    out = jax.block_until_ready(fwd(params, x))

    assert out.shape == (2, 8, 8, 8), out.shape
    assert bool(jnp.all(jnp.isfinite(out)))

    # Tight check vs. a reference that applies the same bf16 casts as the MXU path.
    ref16 = jax.block_until_ready(_ref_forward(params, x, bf16_inputs=True))
    abs_err = float(jnp.max(jnp.abs(out - ref16)))
    assert abs_err < 5e-3, abs_err

    # Loose sanity check vs. the pure-f32 reference.
    ref32 = _ref_forward(params, x, bf16_inputs=False)
    rel_err = float(jnp.max(jnp.abs(out - ref32)) / (jnp.max(jnp.abs(ref32)) + 1e-6))
    assert rel_err < 0.05, rel_err

    print("KERNEL_OK")
</pallas_src>

<mosaic_0001>
module attributes {stable_mosaic.version = 11 : i64} {
  func.func @_downsample_kernel(%arg0: i32, %arg1: memref<2x2x9x64xbf16, #tpu.memory_space<vmem>>, %arg2: memref<3x64x32xbf16, #tpu.memory_space<vmem>>, %arg3: memref<1x32xf32, #tpu.memory_space<vmem>>, %arg4: memref<3x32x64xbf16, #tpu.memory_space<vmem>>, %arg5: memref<1x64xf32, #tpu.memory_space<vmem>>, %arg6: memref<16x64xf32, #tpu.memory_space<vmem>>) attributes {dimension_semantics = [#tpu.dimension_semantics<parallel>], iteration_bounds = array<i64: 1>, scalar_prefetch = 0 : i64, scratch_operands = 0 : i64, tpu.core_type = #tpu.core_type<tc>, window_params = [{transform_indices = @transform_0, window_bounds = array<i64: 2, 2, 9, 64>}, {pipeline_mode = #tpu.pipeline_mode<synchronous>, transform_indices = @transform_1, window_bounds = array<i64: 3, 64, 32>}, {pipeline_mode = #tpu.pipeline_mode<synchronous>, transform_indices = @transform_2, window_bounds = array<i64: 1, 32>}, {pipeline_mode = #tpu.pipeline_mode<synchronous>, transform_indices = @transform_3, window_bounds = array<i64: 3, 32, 64>}, {pipeline_mode = #tpu.pipeline_mode<synchronous>, transform_indices = @transform_4, window_bounds = array<i64: 1, 64>}, {transform_indices = @transform_5, window_bounds = array<i64: 16, 64>}]} {
    %c0 = arith.constant 0 : index
    %c0_0 = arith.constant 0 : index
    %c0_1 = arith.constant 0 : index
    %c0_2 = arith.constant 0 : index
    %0 = vector.load %arg1[%c0, %c0_0, %c0_1, %c0_2] : memref<2x2x9x64xbf16, #tpu.memory_space<vmem>>, vector<2x2x9x64xbf16>
    %c0_3 = arith.constant 0 : index
    %c0_4 = arith.constant 0 : index
    %c0_5 = arith.constant 0 : index
    %1 = vector.load %arg2[%c0_3, %c0_4, %c0_5] : memref<3x64x32xbf16, #tpu.memory_space<vmem>>, vector<3x64x32xbf16>
    %c0_6 = arith.constant 0 : index
    %c0_7 = arith.constant 0 : index
    %c0_8 = arith.constant 0 : index
    %2 = vector.load %arg4[%c0_6, %c0_7, %c0_8] : memref<3x32x64xbf16, #tpu.memory_space<vmem>>, vector<3x32x64xbf16>
    %cst = arith.constant 0.000000e+00 : f32
    %3 = vector.broadcast %cst : f32 to vector<16x32xf32>
    %4 = vector.extract_strided_slice %0 {offsets = [0, 0, 0, 0], sizes = [2, 1, 8, 64], strides = [1, 1, 1, 1]} : vector<2x2x9x64xbf16> to vector<2x1x8x64xbf16>
    %5 = vector.shape_cast %4 : vector<2x1x8x64xbf16> to vector<2x8x64xbf16>
    %6 = vector.shape_cast %5 : vector<2x8x64xbf16> to vector<16x64xbf16>
    %7 = vector.extract_strided_slice %1 {offsets = [0, 0, 0], sizes = [1, 64, 32], strides = [1, 1, 1]} : vector<3x64x32xbf16> to vector<1x64x32xbf16>
    %8 = vector.shape_cast %7 : vector<1x64x32xbf16> to vector<64x32xbf16>
    %cst_9 = arith.constant dense<0.000000e+00> : vector<16x32xf32>
    %9 = tpu.matmul %6, %8, %cst_9 {dimension_numbers = #tpu.dot_dimension_numbers<[1], [0], [0], [1], [0, 0, 1, 1], [], []>} : vector<16x64xbf16>, vector<64x32xbf16>, vector<16x32xf32> -> vector<16x32xf32>
    %10 = arith.addf %3, %9 : vector<16x32xf32>
    %11 = vector.extract_strided_slice %0 {offsets = [0, 1, 0, 0], sizes = [2, 1, 8, 64], strides = [1, 1, 1, 1]} : vector<2x2x9x64xbf16> to vector<2x1x8x64xbf16>
    %12 = vector.shape_cast %11 : vector<2x1x8x64xbf16> to vector<2x8x64xbf16>
    %13 = vector.shape_cast %12 : vector<2x8x64xbf16> to vector<16x64xbf16>
    %14 = vector.extract_strided_slice %1 {offsets = [1, 0, 0], sizes = [1, 64, 32], strides = [1, 1, 1]} : vector<3x64x32xbf16> to vector<1x64x32xbf16>
    %15 = vector.shape_cast %14 : vector<1x64x32xbf16> to vector<64x32xbf16>
    %cst_10 = arith.constant dense<0.000000e+00> : vector<16x32xf32>
    %16 = tpu.matmul %13, %15, %cst_10 {dimension_numbers = #tpu.dot_dimension_numbers<[1], [0], [0], [1], [0, 0, 1, 1], [], []>} : vector<16x64xbf16>, vector<64x32xbf16>, vector<16x32xf32> -> vector<16x32xf32>
    %17 = arith.addf %10, %16 : vector<16x32xf32>
    %18 = vector.extract_strided_slice %0 {offsets = [0, 0, 1, 0], sizes = [2, 1, 8, 64], strides = [1, 1, 1, 1]} : vector<2x2x9x64xbf16> to vector<2x1x8x64xbf16>
    %19 = vector.shape_cast %18 : vector<2x1x8x64xbf16> to vector<2x8x64xbf16>
    %20 = vector.shape_cast %19 : vector<2x8x64xbf16> to vector<16x64xbf16>
    %21 = vector.extract_strided_slice %1 {offsets = [2, 0, 0], sizes = [1, 64, 32], strides = [1, 1, 1]} : vector<3x64x32xbf16> to vector<1x64x32xbf16>
    %22 = vector.shape_cast %21 : vector<1x64x32xbf16> to vector<64x32xbf16>
    %cst_11 = arith.constant dense<0.000000e+00> : vector<16x32xf32>
    %23 = tpu.matmul %20, %22, %cst_11 {dimension_numbers = #tpu.dot_dimension_numbers<[1], [0], [0], [1], [0, 0, 1, 1], [], []>} : vector<16x64xbf16>, vector<64x32xbf16>, vector<16x32xf32> -> vector<16x32xf32>
    %24 = arith.addf %17, %23 : vector<16x32xf32>
    %c0_12 = arith.constant 0 : index
    %c0_13 = arith.constant 0 : index
    %25 = vector.load %arg3[%c0_12, %c0_13] : memref<1x32xf32, #tpu.memory_space<vmem>>, vector<1x32xf32>
    %26 = vector.broadcast %25 : vector<1x32xf32> to vector<16x32xf32>
    %27 = arith.addf %24, %26 : vector<16x32xf32>
    %cst_14 = arith.constant 0.000000e+00 : f32
    %28 = vector.broadcast %cst_14 : f32 to vector<16x32xf32>
    %29 = arith.maximumf %27, %28 : vector<16x32xf32>
    %30 = vector.shape_cast %29 : vector<16x32xf32> to vector<2x8x32xf32>
    %31 = arith.truncf %30 : vector<2x8x32xf32> to vector<2x8x32xbf16>
    %cst_15 = arith.constant 0.000000e+00 : bf16
    %32 = vector.broadcast %cst_15 : bf16 to vector<2x1x32xbf16>
    %33 = tpu.concatenate %32, %31, %32 in 1 : vector<2x1x32xbf16>, vector<2x8x32xbf16>, vector<2x1x32xbf16> -> vector<2x10x32xbf16>
    %cst_16 = arith.constant 0.000000e+00 : f32
    %34 = vector.broadcast %cst_16 : f32 to vector<16x64xf32>
    %35 = vector.extract_strided_slice %33 {offsets = [0, 0, 0], sizes = [2, 8, 32], strides = [1, 1, 1]} : vector<2x10x32xbf16> to vector<2x8x32xbf16>
    %36 = vector.shape_cast %35 : vector<2x8x32xbf16> to vector<16x32xbf16>
    %37 = vector.extract_strided_slice %2 {offsets = [0, 0, 0], sizes = [1, 32, 64], strides = [1, 1, 1]} : vector<3x32x64xbf16> to vector<1x32x64xbf16>
    %38 = vector.shape_cast %37 : vector<1x32x64xbf16> to vector<32x64xbf16>
    %cst_17 = arith.constant dense<0.000000e+00> : vector<16x64xf32>
    %39 = tpu.matmul %36, %38, %cst_17 {dimension_numbers = #tpu.dot_dimension_numbers<[1], [0], [0], [1], [0, 0, 1, 1], [], []>} : vector<16x32xbf16>, vector<32x64xbf16>, vector<16x64xf32> -> vector<16x64xf32>
    %40 = arith.addf %34, %39 : vector<16x64xf32>
    %41 = vector.extract_strided_slice %33 {offsets = [0, 1, 0], sizes = [2, 8, 32], strides = [1, 1, 1]} : vector<2x10x32xbf16> to vector<2x8x32xbf16>
    %42 = vector.shape_cast %41 : vector<2x8x32xbf16> to vector<16x32xbf16>
    %43 = vector.extract_strided_slice %2 {offsets = [1, 0, 0], sizes = [1, 32, 64], strides = [1, 1, 1]} : vector<3x32x64xbf16> to vector<1x32x64xbf16>
    %44 = vector.shape_cast %43 : vector<1x32x64xbf16> to vector<32x64xbf16>
    %cst_18 = arith.constant dense<0.000000e+00> : vector<16x64xf32>
    %45 = tpu.matmul %42, %44, %cst_18 {dimension_numbers = #tpu.dot_dimension_numbers<[1], [0], [0], [1], [0, 0, 1, 1], [], []>} : vector<16x32xbf16>, vector<32x64xbf16>, vector<16x64xf32> -> vector<16x64xf32>
    %46 = arith.addf %40, %45 : vector<16x64xf32>
    %47 = vector.extract_strided_slice %33 {offsets = [0, 2, 0], sizes = [2, 8, 32], strides = [1, 1, 1]} : vector<2x10x32xbf16> to vector<2x8x32xbf16>
    %48 = vector.shape_cast %47 : vector<2x8x32xbf16> to vector<16x32xbf16>
    %49 = vector.extract_strided_slice %2 {offsets = [2, 0, 0], sizes = [1, 32, 64], strides = [1, 1, 1]} : vector<3x32x64xbf16> to vector<1x32x64xbf16>
    %50 = vector.shape_cast %49 : vector<1x32x64xbf16> to vector<32x64xbf16>
    %cst_19 = arith.constant dense<0.000000e+00> : vector<16x64xf32>
    %51 = tpu.matmul %48, %50, %cst_19 {dimension_numbers = #tpu.dot_dimension_numbers<[1], [0], [0], [1], [0, 0, 1, 1], [], []>} : vector<16x32xbf16>, vector<32x64xbf16>, vector<16x64xf32> -> vector<16x64xf32>
    %52 = arith.addf %46, %51 : vector<16x64xf32>
    %c0_20 = arith.constant 0 : index
    %c0_21 = arith.constant 0 : index
    %53 = vector.load %arg5[%c0_20, %c0_21] : memref<1x64xf32, #tpu.memory_space<vmem>>, vector<1x64xf32>
    %54 = vector.broadcast %53 : vector<1x64xf32> to vector<16x64xf32>
    %55 = arith.addf %52, %54 : vector<16x64xf32>
    %cst_22 = arith.constant 0.000000e+00 : f32
    %56 = vector.broadcast %cst_22 : f32 to vector<16x64xf32>
    %57 = arith.maximumf %55, %56 : vector<16x64xf32>
    %c0_23 = arith.constant 0 : index
    %c0_24 = arith.constant 0 : index
    %58 = vector.load %arg6[%c0_23, %c0_24] : memref<16x64xf32, #tpu.memory_space<vmem>>, vector<16x64xf32>
    tpu.vector_store %arg6[%c0_23, %c0_24], %57 {strides = array<i32>} : memref<16x64xf32, #tpu.memory_space<vmem>>, vector<16x64xf32>,
    return
  }
  func.func @transform_0(%arg0: i32) -> (i32, i32, i32, i32) {
    %c0_i32 = arith.constant 0 : i32
    %c0_i32_0 = arith.constant 0 : i32
    %c0_i32_1 = arith.constant 0 : i32
    %c0_i32_2 = arith.constant 0 : i32
    return %arg0, %c0_i32, %c0_i32_0, %c0_i32_1 : i32, i32, i32, i32
  }
  func.func @transform_1(%arg0: i32) -> (i32, i32, i32) {
    %c0_i32 = arith.constant 0 : i32
    %c0_i32_0 = arith.constant 0 : i32
    %c0_i32_1 = arith.constant 0 : i32
    %c0_i32_2 = arith.constant 0 : i32
    return %c0_i32, %c0_i32_0, %c0_i32_1 : i32, i32, i32
  }
  func.func @transform_2(%arg0: i32) -> (i32, i32) {
    %c0_i32 = arith.constant 0 : i32
    %c0_i32_0 = arith.constant 0 : i32
    %c0_i32_1 = arith.constant 0 : i32
    return %c0_i32, %c0_i32_0 : i32, i32
  }
  func.func @transform_3(%arg0: i32) -> (i32, i32, i32) {
    %c0_i32 = arith.constant 0 : i32
    %c0_i32_0 = arith.constant 0 : i32
    %c0_i32_1 = arith.constant 0 : i32
    %c0_i32_2 = arith.constant 0 : i32
    return %c0_i32, %c0_i32_0, %c0_i32_1 : i32, i32, i32
  }
  func.func @transform_4(%arg0: i32) -> (i32, i32) {
    %c0_i32 = arith.constant 0 : i32
    %c0_i32_0 = arith.constant 0 : i32
    %c0_i32_1 = arith.constant 0 : i32
    return %c0_i32, %c0_i32_0 : i32, i32
  }
  func.func @transform_5(%arg0: i32) -> (i32, i32) {
    %c0_i32 = arith.constant 0 : i32
    %c0_i32_0 = arith.constant 0 : i32
    return %arg0, %c0_i32 : i32, i32
  }
}

</mosaic_0001>

<llo_original>
// kernel: tile.13
$region0: #{tile.13}
  #allocation0 [shape = 's32[1]{0}', space=sflag, size = 0x4, scoped, tag = 'scoped memory for tile.13']
  %s0 = inlined_call_operand.vmem [shape: f32[4], index: 0, kind: input, shape index: {}]
  %s1 = inlined_call_operand.vmem [shape: f32[8,4], index: 1, kind: output, shape index: {}]
  // Predicated region
  $region2: #{tile.13} parent=0 // pred_check
    _
  $region3: #{tile.13} parent=0 // pred_check_branch
    %3 = sbr.rel (0) target = $region5
  $region4: #{tile.13} parent=0 // pred_region
    _
  $region5: #{tile.13} parent=0 // pred_fallthru
    _
  %v4 = vld [vmem:[%s0] ss:$0 sm:$0xff]
  %5 = vst [vmem:[%s1] sm:$0xff] %v4

// kernel: tile.14
$region0: #{tile.14}
  %s0 = inlined_call_operand.vmem [shape: f32[8,4], index: 0, kind: input, shape index: {}]
  %s1 = inlined_call_operand.vmem [shape: f32[1,32], index: 1, kind: output, shape index: {}]
  $region1: #{tile.14} parent=0
    #allocation0 [shape = 'u8[4096]{0}', space=vmem, size = 0x1000, scoped, tag = 'scoped mem for output reshape']
    %v2 = vld [vmem:[%s0] sm:$0x1]
    %vm3 = vcmask 31744
    %4 = vst.msk [vmem:[#allocation0] sm:$0x1] %vm3, %v2
    %s5 = scalar_lea.vmem %s0, 7
    %v6 = vld [vmem:[%s5] sm:$0x1]
    %7 = vrot.lane.b32.xlu0 %v6, 28
    %v8 = vpop.permute.xlu0 %7
    %vm9 = vcmask 261344
    %10 = vst.msk [vmem:[#allocation0] sm:$0x1] %vm9, %v8
    %s11 = scalar_lea.vmem %s0, 6
    %v12 = vld [vmem:[%s11] sm:$0x1]
    %13 = vrot.lane.b32.xlu0 %v12, 24
    %v14 = vpop.permute.xlu0 %13
    %vm15 = vcmask 228544
    %16 = vst.msk [vmem:[#allocation0] sm:$0x1] %vm15, %v14
    %s17 = scalar_lea.vmem %s0, 5
    %v18 = vld [vmem:[%s17] sm:$0x1]
    %19 = vrot.lane.b32.xlu0 %v18, 20
    %v20 = vpop.permute.xlu0 %19
    %vm21 = vcmask 195744
    %22 = vst.msk [vmem:[#allocation0] sm:$0x1] %vm21, %v20
    %s23 = scalar_lea.vmem %s0, 4
    %v24 = vld [vmem:[%s23] sm:$0x1]
    %25 = vrot.lane.b32.xlu0 %v24, 16
    %v26 = vpop.permute.xlu0 %25
    %vm27 = vcmask 162944
    %28 = vst.msk [vmem:[#allocation0] sm:$0x1] %vm27, %v26
    %s29 = scalar_lea.vmem %s0, 3
    %v30 = vld [vmem:[%s29] sm:$0x1]
    %31 = vrot.lane.b32.xlu0 %v30, 12
    %v32 = vpop.permute.xlu0 %31
    %vm33 = vcmask 130144
    %34 = vst.msk [vmem:[#allocation0] sm:$0x1] %vm33, %v32
    %s35 = scalar_lea.vmem %s0, 2
    %v36 = vld [vmem:[%s35] sm:$0x1]
    %37 = vrot.lane.b32.xlu0 %v36, 8
    %v38 = vpop.permute.xlu0 %37
    %vm39 = vcmask 97344
    %40 = vst.msk [vmem:[#allocation0] sm:$0x1] %vm39, %v38
    %s41 = scalar_lea.vmem %s0, 1
    %v42 = vld [vmem:[%s41] sm:$0x1]
    %43 = vrot.lane.b32.xlu0 %v42, 4
    %v44 = vpop.permute.xlu0 %43
    %vm45 = vcmask 64544
    %46 = vst.msk [vmem:[#allocation0] sm:$0x1] %vm45, %v44
    %s48 = ssub.s32 2, 1
    %v49 = vld [vmem:[#allocation0] sm:%s48]
    %s51 = ssub.s32 2, 1
    %52 = vst [vmem:[%s1] sm:%s51] %v49

// kernel: tile.18
$region0: #{tile.18}
  #allocation0 [shape = 's32[1]{0}', space=sflag, size = 0x4, scoped, tag = 'scoped memory for tile.18']
  %s0 = inlined_call_operand.vmem [shape: f32[8], index: 0, kind: input, shape index: {}]
  %s1 = inlined_call_operand.vmem [shape: f32[8,8], index: 1, kind: output, shape index: {}]
  // Predicated region
  $region2: #{tile.18} parent=0 // pred_check
    _
  $region3: #{tile.18} parent=0 // pred_check_branch
    %3 = sbr.rel (0) target = $region5
  $region4: #{tile.18} parent=0 // pred_region
    _
  $region5: #{tile.18} parent=0 // pred_fallthru
    _
  %v4 = vld [vmem:[%s0] ss:$0 sm:$0xff]
  %5 = vst [vmem:[%s1] sm:$0xff] %v4

// kernel: tile.19
$region0: #{tile.19}
  %s0 = inlined_call_operand.vmem [shape: f32[8,8], index: 0, kind: input, shape index: {}]
  %s1 = inlined_call_operand.vmem [shape: f32[1,64], index: 1, kind: output, shape index: {}]
  $region1: #{tile.19} parent=0
    #allocation0 [shape = 'u8[4096]{0}', space=vmem, size = 0x1000, scoped, tag = 'scoped mem for output reshape']
    %v2 = vld [vmem:[%s0] sm:$0x1]
    %vm3 = vcmask 64512
    %4 = vst.msk [vmem:[#allocation0] sm:$0x1] %vm3, %v2
    %s5 = scalar_lea.vmem %s0, 7
    %v6 = vld [vmem:[%s5] sm:$0x1]
    %7 = vrot.lane.b32.xlu0 %v6, 56
    %v8 = vpop.permute.xlu0 %7
    %vm9 = vcmask 523712
    %10 = vst.msk [vmem:[#allocation0] sm:$0x1] %vm9, %v8
    %s11 = scalar_lea.vmem %s0, 6
    %v12 = vld [vmem:[%s11] sm:$0x1]
    %13 = vrot.lane.b32.xlu0 %v12, 48
    %v14 = vpop.permute.xlu0 %13
    %vm15 = vcmask 458112
    %16 = vst.msk [vmem:[#allocation0] sm:$0x1] %vm15, %v14
    %s17 = scalar_lea.vmem %s0, 5
    %v18 = vld [vmem:[%s17] sm:$0x1]
    %19 = vrot.lane.b32.xlu0 %v18, 40
    %v20 = vpop.permute.xlu0 %19
    %vm21 = vcmask 392512
    %22 = vst.msk [vmem:[#allocation0] sm:$0x1] %vm21, %v20
    %s23 = scalar_lea.vmem %s0, 4
    %v24 = vld [vmem:[%s23] sm:$0x1]
    %25 = vrot.lane.b32.xlu0 %v24, 32
    %v26 = vpop.permute.xlu0 %25
    %vm27 = vcmask 326912
    %28 = vst.msk [vmem:[#allocation0] sm:$0x1] %vm27, %v26
    %s29 = scalar_lea.vmem %s0, 3
    %v30 = vld [vmem:[%s29] sm:$0x1]
    %31 = vrot.lane.b32.xlu0 %v30, 24
    %v32 = vpop.permute.xlu0 %31
    %vm33 = vcmask 261312
    %34 = vst.msk [vmem:[#allocation0] sm:$0x1] %vm33, %v32
    %s35 = scalar_lea.vmem %s0, 2
    %v36 = vld [vmem:[%s35] sm:$0x1]
    %37 = vrot.lane.b32.xlu0 %v36, 16
    %v38 = vpop.permute.xlu0 %37
    %vm39 = vcmask 195712
    %40 = vst.msk [vmem:[#allocation0] sm:$0x1] %vm39, %v38
    %s41 = scalar_lea.vmem %s0, 1
    %v42 = vld [vmem:[%s41] sm:$0x1]
    %43 = vrot.lane.b32.xlu0 %v42, 8
    %v44 = vpop.permute.xlu0 %43
    %vm45 = vcmask 130112
    %46 = vst.msk [vmem:[#allocation0] sm:$0x1] %vm45, %v44
    %s48 = ssub.s32 2, 1
    %v49 = vld [vmem:[#allocation0] sm:%s48]
    %s51 = ssub.s32 2, 1
    %52 = vst [vmem:[%s1] sm:%s51] %v49

// kernel: downsample_forward.1
$region0: #{downsample_forward.1}
  #allocation0 [shape = 'u32[]', space=smem, size = 0x4, offset = 0x4, fixed_abs, tag = 'smem constant byte address 0x4 - core index']
  #allocation1 [shape = 'u32[72,128]{1,0:T(1,128)}', space=vmem, size = 0x9000, scoped, tag = 'internal scratch']
  %s0 = inlined_call_operand.vmem [shape: bf16[2,2,9,64], index: 0, kind: input, shape index: {}]
  %s1 = inlined_call_operand.vmem [shape: bf16[3,64,32], index: 1, kind: input, shape index: {}]
  %s2 = inlined_call_operand.vmem [shape: f32[1,32], index: 2, kind: input, shape index: {}]
  %s3 = inlined_call_operand.vmem [shape: bf16[3,32,64], index: 3, kind: input, shape index: {}]
  %s4 = inlined_call_operand.vmem [shape: f32[1,64], index: 4, kind: input, shape index: {}]
  %s5 = inlined_call_operand.vmem [shape: f32[16,64], index: 5, kind: output, shape index: {}]
  %s6 = sld [smem:[#allocation0]]
  $region30: #{downsample_forward.1} parent=0
    _
  %s8 = ssub.s32 1, %s6
  %s9 = scalar_select 0, %s8, %s6
  // Predicated region
  $region2: #{downsample_forward.1} parent=0 // pred_check
    _
  $region3: #{downsample_forward.1} parent=0 // pred_check_branch
    %11 = sbr.rel (0) target = $region5
  $region4: #{downsample_forward.1} parent=0 // pred_region
    _
  $region5: #{downsample_forward.1} parent=0 // pred_fallthru
    _
  // Predicated region
  $region6: #{downsample_forward.1} parent=0 // pred_check
    _
  $region7: #{downsample_forward.1} parent=0 // pred_check_branch
    %13 = sbr.rel (0) target = $region9
  $region8: #{downsample_forward.1} parent=0 // pred_region
    _
  $region9: #{downsample_forward.1} parent=0 // pred_fallthru
    _
  // Predicated region
  $region10: #{downsample_forward.1} parent=0 // pred_check
    _
  $region11: #{downsample_forward.1} parent=0 // pred_check_branch
    %15 = sbr.rel (0) target = $region13
  $region12: #{downsample_forward.1} parent=0 // pred_region
    _
  $region13: #{downsample_forward.1} parent=0 // pred_fallthru
    _
  // Predicated region
  $region14: #{downsample_forward.1} parent=0 // pred_check
    _
  $region15: #{downsample_forward.1} parent=0 // pred_check_branch
    %17 = sbr.rel (0) target = $region17
  $region16: #{downsample_forward.1} parent=0 // pred_region
    _
  $region17: #{downsample_forward.1} parent=0 // pred_fallthru
    _
  // Predicated region
  $region18: #{downsample_forward.1} parent=0 // pred_check
    _
  $region19: #{downsample_forward.1} parent=0 // pred_check_branch
    %19 = sbr.rel (0) target = $region21
  $region20: #{downsample_forward.1} parent=0 // pred_region
    _
  $region21: #{downsample_forward.1} parent=0 // pred_fallthru
    _
  %v21 = vld [vmem:[%s0] sm:$0xf]
  %v22 = vld [vmem:[%s0 + $0x4] sm:$0x1]
  %v23 = vld [vmem:[%s0 + $0x8] sm:$0xf]
  %v24 = vld [vmem:[%s0 + $0x10] sm:$0xf]
  %v25 = vld [vmem:[%s0 + $0x14] sm:$0x1]
  %v26 = vld [vmem:[%s0 + $0x18] sm:$0xf]
  %v27 = vld [vmem:[%s1] sm:$0xf]
  %v28 = vld [vmem:[%s1 + $0x4] sm:$0xf]
  %v29 = vld [vmem:[%s1 + $0x8] sm:$0xf]
  %v30 = vld [vmem:[%s1 + $0xc] sm:$0xf]
  %v31 = vld [vmem:[%s1 + $0x10] sm:$0xf]
  %v32 = vld [vmem:[%s1 + $0x14] sm:$0xf]
  %v33 = vld [vmem:[%s1 + $0x18] sm:$0xf]
  %v34 = vld [vmem:[%s1 + $0x1c] sm:$0xf]
  %v35 = vld [vmem:[%s1 + $0x20] sm:$0xf]
  %v36 = vld [vmem:[%s1 + $0x24] sm:$0xf]
  %v37 = vld [vmem:[%s1 + $0x28] sm:$0xf]
  %v38 = vld [vmem:[%s1 + $0x2c] sm:$0xf]
  %v39 = vld [vmem:[%s1 + $0x30] sm:$0xf]
  %v40 = vld [vmem:[%s1 + $0x34] sm:$0xf]
  %v41 = vld [vmem:[%s1 + $0x38] sm:$0xf]
  %v42 = vld [vmem:[%s1 + $0x3c] sm:$0xf]
  %v43 = vld [vmem:[%s1 + $0x40] sm:$0xf]
  %v44 = vld [vmem:[%s1 + $0x44] sm:$0xf]
  %v45 = vld [vmem:[%s1 + $0x48] sm:$0xf]
  %v46 = vld [vmem:[%s1 + $0x4c] sm:$0xf]
  %v47 = vld [vmem:[%s1 + $0x50] sm:$0xf]
  %v48 = vld [vmem:[%s1 + $0x54] sm:$0xf]
  %v49 = vld [vmem:[%s1 + $0x58] sm:$0xf]
  %v50 = vld [vmem:[%s1 + $0x5c] sm:$0xf]
  %v51 = vld [vmem:[%s3] sm:$0xf]
  %v52 = vld [vmem:[%s3 + $0x4] sm:$0xf]
  %v53 = vld [vmem:[%s3 + $0x8] sm:$0xf]
  %v54 = vld [vmem:[%s3 + $0xc] sm:$0xf]
  %v55 = vld [vmem:[%s3 + $0x10] sm:$0xf]
  %v56 = vld [vmem:[%s3 + $0x14] sm:$0xf]
  %v57 = vld [vmem:[%s3 + $0x18] sm:$0xf]
  %v58 = vld [vmem:[%s3 + $0x1c] sm:$0xf]
  %v59 = vld [vmem:[%s3 + $0x20] sm:$0xf]
  %v60 = vld [vmem:[%s3 + $0x24] sm:$0xf]
  %v61 = vld [vmem:[%s3 + $0x28] sm:$0xf]
  %v62 = vld [vmem:[%s3 + $0x2c] sm:$0xf]
  %v65 = vunpack.c.l.b16 %v23
  %v66 = vunpack.c.l.b16 %v26
  %v67 = vpack.c.b16 %v66, %v65
  %v76 = vunpack.c.l.b16 %v35
  %v77 = vunpack.c.l.b16 %v36
  %v78 = vunpack.c.l.b16 %v37
  %v79 = vunpack.c.l.b16 %v38
  %v80 = vunpack.c.l.b16 %v39
  %v81 = vunpack.c.l.b16 %v40
  %v82 = vunpack.c.l.b16 %v41
  %v83 = vunpack.c.l.b16 %v42
  %v84 = vpack.c.b16 %v77, %v76
  %v85 = vpack.c.b16 %v79, %v78
  %v86 = vpack.c.b16 %v81, %v80
  %v87 = vpack.c.b16 %v83, %v82
  %vm92 = vcmask 523264
  %v94 = vsel %vm92, %v67, 0
  %96 = vmatpush.bf16.msra.mxu0 0
  %97 = vmatpush.bf16.msra.mxu0 0
  %98 = vmatpush.bf16.msra.mxu0 0
  %99 = vmatpush.bf16.msra.mxu0 0
  %100 = vmatpush.bf16.msra.mxu0 %v87
  %101 = vmatpush.bf16.msra.mxu0 %v86
  %102 = vmatpush.bf16.msra.mxu0 %v85
  %103 = vmatpush.bf16.msra.mxu0 %v84
  %104 = vmatmul.bf16.gmra.mxu0 %v94
  %v105 = vpop.f32.mrf.mxu0
  %v106 = vadd.f32 0.0, %v105
  %v107 = vpop.f32.mrf.mxu0
  %v108 = vadd.f32 0.0, %v107
  %109 = vdwg.mxu0
  %v112 = vunpack.c.l.b16 %v21
  %v113 = vunpack.c.l.b16 %v24
  %v114 = vpack.c.b16 %v113, %v112
  %v123 = vunpack.c.l.b16 %v27
  %v124 = vunpack.c.l.b16 %v28
  %v125 = vunpack.c.l.b16 %v29
  %v126 = vunpack.c.l.b16 %v30
  %v127 = vunpack.c.l.b16 %v31
  %v128 = vunpack.c.l.b16 %v32
  %v129 = vunpack.c.l.b16 %v33
  %v130 = vunpack.c.l.b16 %v34
  %v131 = vpack.c.b16 %v124, %v123
  %v132 = vpack.c.b16 %v126, %v125
  %v133 = vpack.c.b16 %v128, %v127
  %v134 = vpack.c.b16 %v130, %v129
  %v140 = vsel %vm92, %v114, 0
  %142 = vmatpush.bf16.msra.mxu0 0
  %143 = vmatpush.bf16.msra.mxu0 0
  %144 = vmatpush.bf16.msra.mxu0 0
  %145 = vmatpush.bf16.msra.mxu0 0
  %146 = vmatpush.bf16.msra.mxu0 %v134
  %147 = vmatpush.bf16.msra.mxu0 %v133
  %148 = vmatpush.bf16.msra.mxu0 %v132
  %149 = vmatpush.bf16.msra.mxu0 %v131
  %150 = vmatmul.bf16.gmra.mxu0 %v140
  %v151 = vpop.f32.mrf.mxu0
  %v152 = vadd.f32 %v106, %v151
  %v153 = vpop.f32.mrf.mxu0
  %v154 = vadd.f32 %v108, %v153
  %155 = vdwg.mxu0
  %vm156 = vsmask.f32 3328
  %vm157 = vsmask.f32 7440
  %vm158 = vmor %vm156, %vm157
  %v160 = vshrl.u32 %v21, 16
  %v162 = vrot.slane %v160, 4
  %v163 = vshll.u32 %v21, 16
  %v165 = vrot.slane %v163, 5
  %v166 = vor.u32 %v162, %v165
  %v167 = vrot.slane %v166, 4
  %v169 = vshll.u32 %v22, 16
  %v171 = vrot.slane %v169, 5
  %v172 = vsel %vm158, %v167, %v171
  %v174 = vshrl.u32 %v24, 16
  %v176 = vrot.slane %v174, 4
  %v177 = vshll.u32 %v24, 16
  %v179 = vrot.slane %v177, 5
  %v180 = vor.u32 %v176, %v179
  %v181 = vrot.slane %v180, 4
  %v183 = vshll.u32 %v25, 16
  %v185 = vrot.slane %v183, 5
  %v186 = vsel %vm158, %v181, %v185
  %v187 = vunpack.c.l.b16 %v172
  %v188 = vunpack.c.l.b16 %v186
  %v189 = vpack.c.b16 %v188, %v187
  %v198 = vunpack.c.l.b16 %v43
  %v199 = vunpack.c.l.b16 %v44
  %v200 = vunpack.c.l.b16 %v45
  %v201 = vunpack.c.l.b16 %v46
  %v202 = vunpack.c.l.b16 %v47
  %v203 = vunpack.c.l.b16 %v48
  %v204 = vunpack.c.l.b16 %v49
  %v205 = vunpack.c.l.b16 %v50
  %v206 = vpack.c.b16 %v199, %v198
  %v207 = vpack.c.b16 %v201, %v200
  %v208 = vpack.c.b16 %v203, %v202
  %v209 = vpack.c.b16 %v205, %v204
  %v215 = vsel %vm92, %v189, 0
  %217 = vmatpush.bf16.msra.mxu0 0
  %218 = vmatpush.bf16.msra.mxu0 0
  %219 = vmatpush.bf16.msra.mxu0 0
  %220 = vmatpush.bf16.msra.mxu0 0
  %221 = vmatpush.bf16.msra.mxu0 %v209
  %222 = vmatpush.bf16.msra.mxu0 %v208
  %223 = vmatpush.bf16.msra.mxu0 %v207
  %224 = vmatpush.bf16.msra.mxu0 %v206
  %225 = vmatmul.bf16.gmra.mxu0 %v215
  %v226 = vpop.f32.mrf.mxu0
  %v227 = vadd.f32 0.0, %v226
  %v228 = vpop.f32.mrf.mxu0
  %v229 = vadd.f32 0.0, %v228
  %230 = vdwg.mxu0
  %v231 = vadd.f32 %v152, %v227
  %v232 = vadd.f32 %v154, %v229
  %v233 = vld [vmem:[%s2] sm:$0x1]
  %v235 = vperm.slane %v233, 0
  %v237 = vadd.f32 %v231, %v235
  %v238 = vadd.f32 %v232, %v235
  %v239 = vmax.f32 %v237, 0.0
  %v240 = vmax.f32 %v238, 0.0
  %v241 = vpack.c.bf16 %v239, %v239
  %v242 = vpack.c.bf16 %v240, %v240
  %v245 = vunpack.c.l.b16 %v241
  %v246 = vunpack.c.l.b16 %v242
  %v247 = vpack.c.b16 %v245, %v245
  %v248 = vpack.c.b16 %v246, %v246
  %v250 = vshrl.u32 %v247, 16
  %v252 = vrot.slane %v250, 7
  %v253 = vshll.u32 %v247, 16
  %v255 = vor.u32 %v252, %v253
  %v257 = vshrl.u32 %v248, 16
  %v259 = vrot.slane %v257, 7
  %v260 = vshll.u32 %v248, 16
  %v262 = vor.u32 %v259, %v260
  %vm265 = vcmask 1040384
  %vm266 = vsmask.f32 256
  %vm267 = vmand %vm265, %vm266
  %v268 = vsel %vm267, 0, %v255
  %v269 = vsel %vm267, 0, %v262
  %vm270 = vcmask 1044480
  %vm271 = vsmask.f32 4352
  %vm272 = vmand %vm270, %vm271
  %v273 = vsel %vm272, %v268, 0
  %v274 = vsel %vm272, %v269, 0
  %v277 = vunpack.c.l.b16 %v273
  %v278 = vunpack.c.h.b16 %v273
  %v279 = vunpack.c.l.b16 %v274
  %v280 = vunpack.c.h.b16 %v274
  %v281 = vpack.c.b16 %v277, %v277
  %v282 = vpack.c.b16 %v278, %v278
  %v283 = vpack.c.b16 %v279, %v279
  %v284 = vpack.c.b16 %v280, %v280
  %v286 = vshrl.u32 %v281, 16
  %v288 = vrot.slane %v286, 4
  %v289 = vshll.u32 %v281, 16
  %v291 = vrot.slane %v289, 5
  %v292 = vor.u32 %v288, %v291
  %v293 = vrot.slane %v292, 4
  %v295 = vshll.u32 %v282, 16
  %v297 = vrot.slane %v295, 5
  %v298 = vsel %vm158, %v293, %v297
  %v300 = vshrl.u32 %v283, 16
  %v302 = vrot.slane %v300, 4
  %v303 = vshll.u32 %v283, 16
  %v305 = vrot.slane %v303, 5
  %v306 = vor.u32 %v302, %v305
  %v307 = vrot.slane %v306, 4
  %v309 = vshll.u32 %v284, 16
  %v311 = vrot.slane %v309, 5
  %v312 = vsel %vm158, %v307, %v311
  %v313 = vunpack.c.l.b16 %v298
  %v314 = vunpack.c.l.b16 %v312
  %v315 = vpack.c.b16 %v314, %v313
  %v320 = vunpack.c.l.b16 %v55
  %v321 = vunpack.c.l.b16 %v56
  %v322 = vunpack.c.l.b16 %v57
  %v323 = vunpack.c.l.b16 %v58
  %v324 = vpack.c.b16 %v321, %v320
  %v325 = vpack.c.b16 %v323, %v322
  %vm328 = vcmask 261120
  %v330 = vsel %vm328, %v315, 0
  %332 = vmatpush.bf16.msra.mxu0 0
  %333 = vmatpush.bf16.msra.mxu0 0
  %334 = vmatpush.bf16.msra.mxu0 0
  %335 = vmatpush.bf16.msra.mxu0 0
  %336 = vmatpush.bf16.msra.mxu0 0
  %337 = vmatpush.bf16.msra.mxu0 0
  %338 = vmatpush.bf16.msra.mxu0 %v325
  %339 = vmatpush.bf16.msra.mxu0 %v324
  %340 = vmatmul.bf16.gmra.mxu0 %v330
  %v341 = vpop.f32.mrf.mxu0
  %v342 = vadd.f32 0.0, %v341
  %v343 = vpop.f32.mrf.mxu0
  %v344 = vadd.f32 0.0, %v343
  %345 = vdwg.mxu0
  %v346 = vpack.c.b16 %v279, %v277
  %v351 = vunpack.c.l.b16 %v51
  %v352 = vunpack.c.l.b16 %v52
  %v353 = vunpack.c.l.b16 %v53
  %v354 = vunpack.c.l.b16 %v54
  %v355 = vpack.c.b16 %v352, %v351
  %v356 = vpack.c.b16 %v354, %v353
  %v360 = vsel %vm328, %v346, 0
  %362 = vmatpush.bf16.msra.mxu0 0
  %363 = vmatpush.bf16.msra.mxu0 0
  %364 = vmatpush.bf16.msra.mxu0 0
  %365 = vmatpush.bf16.msra.mxu0 0
  %366 = vmatpush.bf16.msra.mxu0 0
  %367 = vmatpush.bf16.msra.mxu0 0
  %368 = vmatpush.bf16.msra.mxu0 %v356
  %369 = vmatpush.bf16.msra.mxu0 %v355
  %370 = vmatmul.bf16.gmra.mxu0 %v360
  %v371 = vpop.f32.mrf.mxu0
  %v372 = vadd.f32 %v342, %v371
  %v373 = vpop.f32.mrf.mxu0
  %v374 = vadd.f32 %v344, %v373
  %375 = vdwg.mxu0
  %vm376 = vcmask 1042432
  %vm377 = vcmask 1046532
  %vm378 = vmor %vm376, %vm377
  %v379 = vrot.slane %v281, 5
  %v380 = vrot.slane %v379, 4
  %v381 = vrot.slane %v282, 5
  %v382 = vsel %vm378, %v380, %v381
  %v383 = vrot.slane %v283, 5
  %v384 = vrot.slane %v383, 4
  %v385 = vrot.slane %v284, 5
  %v386 = vsel %vm378, %v384, %v385
  %v387 = vunpack.c.l.b16 %v382
  %v388 = vunpack.c.l.b16 %v386
  %v389 = vpack.c.b16 %v388, %v387
  %v394 = vunpack.c.l.b16 %v59
  %v395 = vunpack.c.l.b16 %v60
  %v396 = vunpack.c.l.b16 %v61
  %v397 = vunpack.c.l.b16 %v62
  %v398 = vpack.c.b16 %v395, %v394
  %v399 = vpack.c.b16 %v397, %v396
  %v403 = vsel %vm328, %v389, 0
  %405 = vmatpush.bf16.msra.mxu0 0
  %406 = vmatpush.bf16.msra.mxu0 0
  %407 = vmatpush.bf16.msra.mxu0 0
  %408 = vmatpush.bf16.msra.mxu0 0
  %409 = vmatpush.bf16.msra.mxu0 0
  %410 = vmatpush.bf16.msra.mxu0 0
  %411 = vmatpush.bf16.msra.mxu0 %v399
  %412 = vmatpush.bf16.msra.mxu0 %v398
  %413 = vmatmul.bf16.gmra.mxu0 %v403
  %v414 = vpop.f32.mrf.mxu0
  %v415 = vadd.f32 0.0, %v414
  %v416 = vpop.f32.mrf.mxu0
  %v417 = vadd.f32 0.0, %v416
  %418 = vdwg.mxu0
  %v419 = vadd.f32 %v372, %v415
  %v420 = vadd.f32 %v374, %v417
  %v421 = vld [vmem:[%s4] sm:$0x1]
  %v423 = vperm.slane %v421, 0
  %v425 = vadd.f32 %v419, %v423
  %v426 = vadd.f32 %v420, %v423
  %v427 = vmax.f32 %v425, 0.0
  %v428 = vmax.f32 %v426, 0.0
  %429 = vst.msk [vmem:[%s5] sm:$0xff] %vm92, %v427
  %430 = vst.msk [vmem:[%s5 + $0x8] sm:$0xff] %vm92, %v428
  // Predicated region
  $region22: #{downsample_forward.1} parent=0 // pred_check
    _
  $region23: #{downsample_forward.1} parent=0 // pred_check_branch
    %432 = sbr.rel (0) target = $region25
  $region24: #{downsample_forward.1} parent=0 // pred_region
    _
  $region25: #{downsample_forward.1} parent=0 // pred_fallthru
    _
  // Predicated region
  $region26: #{downsample_forward.1} parent=0 // pred_check
    _
  $region27: #{downsample_forward.1} parent=0 // pred_check_branch
    %434 = sbr.rel (0) target = $region29
  $region28: #{downsample_forward.1} parent=0 // pred_region
    _
  $region29: #{downsample_forward.1} parent=0 // pred_fallthru
    _

</llo_original>
